<compile_context>
chip_gen: v6e
topology: v6e:2x2x1
jax: 0.10.0
libtpu: 0.0.40
codegen_flags: <defaults>
</compile_context>

<pallas_src>
import functools

import jax
import jax.numpy as jnp
from jax.experimental import pallas as pl
from jax.experimental.pallas import tpu as pltpu


def _round_up(x, m):
    return ((x + m - 1) // m) * m


# ------------------------------ kernel ---------------------------------------
def _make_self_attn_kernel(TQ, N, C, P, cdtype, emit_attn):
    V0 = 2 * P  # first row of the [V ; ones] section inside the fused projection

    def kernel(x_ref, wqkv_ref, bias_ref, gamma_ref, out_ref, *rest):
        # x_ref    : (C, N)   f32    input feature map (channels, W*H), resident per batch
        # wqkv_ref : (R, C)   cdtype fused [Wq ; 0pad ; Wk ; 0pad ; Wv ; 0] weights
        # bias_ref : (R, 1)   f32    fused [bq ; 0 ; 0 (bk folded away) ; bv ; 1] column
        # gamma    : (1, 1)   f32    scalar in SMEM
        # out_ref  : (C, TQ)  f32    lane-dense output chunk
        # attn_ref : (TQ, N)         attention chunk (only if emit_attn)
        # qkv_scr  : (R, N)   cdtype fused Q/K/[V;1] projection, persists across chunks
        if emit_attn:
            attn_ref, qkv_scr = rest
        else:
            (qkv_scr,) = rest

        qi = pl.program_id(1)

        # ---- once per batch element: single fused projection matmul ----------------
        @pl.when(qi == 0)
        def _():
            x_c = x_ref[...].astype(cdtype)                               # (C, N)
            proj = jnp.dot(wqkv_ref[...], x_c,
                           preferred_element_type=jnp.float32)            # (R, N)
            qkv_scr[...] = (proj + bias_ref[...]).astype(cdtype)

        col0 = pl.multiple_of(qi * TQ, TQ)

        # Padding rows (>= C//8) of the q/k sections are exactly zero, so including them
        # in the contraction is exact and keeps all slices tile-aligned.
        q = qkv_scr[pl.ds(0, P), pl.ds(col0, TQ)]                         # (P, TQ)
        k = qkv_scr[pl.ds(P, P), :]                                       # (P, N)
        v1 = qkv_scr[pl.ds(V0, C + 1), :]                                 # (C+1, N), last row == 1

        # energy[i, j] = q[:, i] . k[:, j]
        energy = jax.lax.dot_general(q, k, (((0,), (0,)), ((), ())),
                                     preferred_element_type=jnp.float32)  # (TQ, N)

        # Numerically stable softmax numerator; normalization is deferred to the output.
        m = jnp.max(energy, axis=-1, keepdims=True)                       # (TQ, 1)
        e = jnp.exp(energy - m)                                           # (TQ, N) f32 (EUP)
        e_c = e.astype(cdtype)

        # out_aug[c, i] = sum_j v1[c, j] * e[i, j]; the trailing "ones" row of v1 makes
        # out_aug[C, :] the exp row-sums in (1, TQ) lane orientation for free on the MXU.
        out_aug = jax.lax.dot_general(v1, e_c, (((1,), (1,)), ((), ())),
                                      preferred_element_type=jnp.float32)  # (C+1, TQ)
        inv_l = pl.reciprocal(out_aug[C:C + 1, :], approx=True)            # (1, TQ) on EUP
        attn_out = out_aug[0:C, :] * inv_l                                 # (C, TQ)

        x_chunk = x_ref[:, pl.ds(col0, TQ)]                                # (C, TQ) f32
        out_ref[...] = gamma_ref[0, 0] * attn_out + x_chunk

        if emit_attn:
            # Debug/aux path only: explicit normalized attention map (reciprocal-multiply,
            # exact reciprocal so rows sum to 1 within f32 rounding).
            inv_row = pl.reciprocal(jnp.sum(e, axis=-1, keepdims=True), approx=False)
            attn_ref[...] = (e * inv_row).astype(attn_ref.dtype)

    return kernel


# ------------------------------ wrapper ---------------------------------------
def self_attn_forward(params, x, *, with_attn=False, tq=256,
                      compute_dtype=jnp.bfloat16, attn_dtype=jnp.float32):
    """Forward of Self_Attn.  x: (B, C, W, H) NCHW like PyTorch."""
    B, C, W, H = x.shape
    assert C % 8 == 0, "in_dim must be divisible by 8 (query/key channels = in_dim // 8)"
    C8 = C // 8
    N = W * H

    # Query-chunk size: a multiple of 128 (lane-dense output stores) dividing N, else N.
    TQ = None
    for cand in (tq, 512, 256, 128):
        if cand and cand % 128 == 0 and cand <= N and N % cand == 0:
            TQ = cand
            break
    if TQ is None:
        TQ = N          # fallback for awkward spatial sizes (whole-row energy tile)
    n_chunks = N // TQ

    # Fused projection layout: [q | pad | k | pad | v | ones], section starts aligned to
    # 16 rows (bf16 sublane tile) so every in-kernel slice is tile-aligned.
    P = _round_up(C8, 16)
    R = 2 * P + C + 1

    f32 = jnp.float32
    wqkv = jnp.zeros((R, C), f32)
    wqkv = wqkv.at[0:C8, :].set(params["wq"].astype(f32))
    wqkv = wqkv.at[P:P + C8, :].set(params["wk"].astype(f32))
    wqkv = wqkv.at[2 * P:2 * P + C, :].set(params["wv"].astype(f32))
    wqkv = wqkv.astype(compute_dtype)

    bias = jnp.zeros((R, 1), f32)
    bias = bias.at[0:C8, 0].set(params["bq"].astype(f32))
    # Key bias folded away: with bq kept in q, bk's energy contribution is constant along
    # the softmax axis and cancels exactly.
    bias = bias.at[2 * P:2 * P + C, 0].set(params["bv"].astype(f32))
    bias = bias.at[R - 1, 0].set(1.0)   # "ones" row -> exp row-sums via the MXU

    gamma = params["gamma"].reshape(1, 1).astype(f32)

    # NCHW -> (B, C, N): a pure reshape; no transpose on either side of the kernel.
    x_cn = x.reshape(B, C, N).astype(f32)

    kernel = _make_self_attn_kernel(TQ, N, C, P, compute_dtype, with_attn)

    out_shapes = [jax.ShapeDtypeStruct((B, C, N), f32)]
    out_specs = [pl.BlockSpec((None, C, TQ), lambda b, q: (b, 0, q))]
    if with_attn:
        out_shapes.append(jax.ShapeDtypeStruct((B, N, N), attn_dtype))
        out_specs.append(pl.BlockSpec((None, TQ, N), lambda b, q: (b, q, 0)))

    # Explicit VMEM budget (so v7x's 64 MiB does not silently lose pipelining headroom).
    itemsize = jnp.dtype(compute_dtype).itemsize
    est = (2 * C * N * 4                                   # resident x block (dbl-buffered)
           + R * N * itemsize                              # fused q/k/v scratch
           + 2 * R * C * itemsize + 2 * R * 4              # weights + bias
           + 2 * C * TQ * 4                                # output blocks
           + (2 * TQ * N * jnp.dtype(attn_dtype).itemsize if with_attn else 0)
           + 4 * TQ * N * 4)                               # energy / exp temporaries
    vmem_limit = int(min(max(est, 32 * 1024 * 1024), 100 * 1024 * 1024))
    # TODO(synk): for very large N on v7x (64 MiB VMEM), tile the K/V side flash-style
    # (extra KV grid axis / emit_pipeline) instead of keeping the full (R, N) scratch.

    res = pl.pallas_call(
        kernel,
        out_shape=tuple(out_shapes),
        grid=(B, n_chunks),
        in_specs=[
            pl.BlockSpec((None, C, N), lambda b, q: (b, 0, 0)),   # x: resident per batch
            pl.BlockSpec((R, C), lambda b, q: (0, 0)),            # fused projection weights
            pl.BlockSpec((R, 1), lambda b, q: (0, 0)),            # fused bias column
            pl.BlockSpec(memory_space=pltpu.MemorySpace.SMEM),    # gamma scalar
        ],
        out_specs=tuple(out_specs),
        scratch_shapes=[pltpu.VMEM((R, N), compute_dtype)],
        compiler_params=pltpu.CompilerParams(
            # Batch axis parallel (megacore); chunk axis carries the K/V scratch -> arbitrary.
            # TODO(synk): for B == 1 on v7x, shard the chunk axis across the two TensorCores
            # (per-core K/V recompute) so the second core does not idle.
            dimension_semantics=("parallel", "arbitrary"),
            vmem_limit_bytes=vmem_limit),
    )(x_cn, wqkv, bias, gamma)

    out = res[0].reshape(B, C, W, H)
    if with_attn:
        return out, res[1]
    return out


# ------------------------------ pure-JAX reference -----------------------------
def self_attn_reference(params, x):
    B, C, W, H = x.shape
    N = W * H
    xf = x.reshape(B, C, N).astype(jnp.float32)
    hp = jax.lax.Precision.HIGHEST
    q = jnp.einsum("oc,bcn->bon", params["wq"], xf, precision=hp) + params["bq"][None, :, None]
    k = jnp.einsum("oc,bcn->bon", params["wk"], xf, precision=hp) + params["bk"][None, :, None]
    v = jnp.einsum("oc,bcn->bon", params["wv"], xf, precision=hp) + params["bv"][None, :, None]
    energy = jnp.einsum("bci,bcj->bij", q, k, precision=hp)        # torch: bmm(q^T, k)
    attn = jax.nn.softmax(energy, axis=-1)
    out = jnp.einsum("bcj,bij->bci", v, attn, precision=hp)        # torch: bmm(v, attn^T)
    return params["gamma"].reshape(()) * out.reshape(B, C, W, H) + x


# ------------------------------ params ----------------------------------------
def init_params(key, in_dim):
    # 1x1-conv weights in PyTorch layout (out_channels, in_channels).
    c8 = in_dim // 8
    kq, kk, kv, kb = jax.random.split(key, 4)
    s = 1.0 / (in_dim ** 0.5)
    kb1, kb2, kb3 = jax.random.split(kb, 3)
    return {
        "wq": s * jax.random.normal(kq, (c8, in_dim), jnp.float32),
        "bq": 0.05 * jax.random.normal(kb1, (c8,), jnp.float32),
        "wk": s * jax.random.normal(kk, (c8, in_dim), jnp.float32),
        "bk": 0.05 * jax.random.normal(kb2, (c8,), jnp.float32),
        "wv": s * jax.random.normal(kv, (in_dim, in_dim), jnp.float32),
        "bv": 0.05 * jax.random.normal(kb3, (in_dim,), jnp.float32),
        # nn.Parameter(torch.zeros(1)) in the source; nonzero here so the attention path
        # actually contributes in the smoke test.
        "gamma": jnp.array([0.5], jnp.float32),
    }


# ------------------------------ demo / smoke test -------------------------------
if __name__ == "__main__":
    key = jax.random.PRNGKey(0)
    pkey, xkey = jax.random.split(key)

    B, C, W, H = 2, 32, 16, 16          # in_dim=32 -> query/key channels = 4, N = 256
    params = init_params(pkey, C)
    x = jax.random.normal(xkey, (B, C, W, H), jnp.float32)

    ref = self_attn_reference(params, x)

    # Default fast path (bf16 MXU feeds, TQ=256).
    fwd = jax.jit(functools.partial(self_attn_forward, params))
    out = fwd(x)
    jax.block_until_ready(out)
    assert out.shape == (B, C, W, H)
    assert bool(jnp.all(jnp.isfinite(out)))
    max_err = float(jnp.max(jnp.abs(out - ref)))
    mean_err = float(jnp.mean(jnp.abs(out - ref)))
    # bf16 matmul feeds -> relaxed tolerance vs the f32 reference (per perf review).
    assert max_err < 1e-1, f"bf16 path max abs error vs reference: {max_err}"
    assert mean_err < 1e-2, f"bf16 path mean abs error vs reference: {mean_err}"

    # f32 validation path, multi-chunk (TQ=128 -> 2 query chunks): tight tolerance.
    out_f32 = jax.jit(functools.partial(self_attn_forward, params,
                                        compute_dtype=jnp.float32, tq=128))(x)
    jax.block_until_ready(out_f32)
    err_f32 = float(jnp.max(jnp.abs(out_f32 - ref)))
    assert err_f32 < 5e-3, f"f32 path max abs error vs reference: {err_f32}"

    # with_attn=True path: also returns the (B, N, N) attention map.
    out2, attn = jax.jit(functools.partial(self_attn_forward, params, with_attn=True))(x)
    jax.block_until_ready((out2, attn))
    assert attn.shape == (B, W * H, W * H)
    assert float(jnp.max(jnp.abs(jnp.sum(attn, axis=-1) - 1.0))) < 1e-3
    assert float(jnp.max(jnp.abs(out2 - out))) < 1e-3

    print("KERNEL_OK")
</pallas_src>

<mosaic_0001>
module attributes {stable_mosaic.version = 11 : i64} {
  func.func @kernel(%arg0: i32, %arg1: i32, %arg2: memref<1x32x256xf32, #tpu.memory_space<vmem>>, %arg3: memref<65x32xbf16, #tpu.memory_space<vmem>>, %arg4: memref<65x1xf32, #tpu.memory_space<vmem>>, %arg5: memref<1x1xf32, #tpu.memory_space<smem>>, %arg6: memref<1x32x256xf32, #tpu.memory_space<vmem>>, %arg7: memref<65x256xbf16, #tpu.memory_space<vmem>>) attributes {dimension_semantics = [#tpu.dimension_semantics<parallel>, #tpu.dimension_semantics<arbitrary>], iteration_bounds = array<i64: 2, 1>, scalar_prefetch = 0 : i64, scratch_operands = 1 : i64, tpu.core_type = #tpu.core_type<tc>, window_params = [{transform_indices = @transform_0, window_bounds = array<i64: 1, 32, 256>}, {pipeline_mode = #tpu.pipeline_mode<synchronous>, transform_indices = @transform_1, window_bounds = array<i64: 65, 32>}, {pipeline_mode = #tpu.pipeline_mode<synchronous>, transform_indices = @transform_2, window_bounds = array<i64: 65, 1>}, {transform_indices = @transform_3, window_bounds = array<i64: 1, 1>}, {transform_indices = @transform_4, window_bounds = array<i64: 1, 32, 256>}]} {
    %c0_i32 = arith.constant 0 : i32
    %0 = arith.cmpi eq, %arg1, %c0_i32 : i32
    %1 = arith.extui %0 : i1 to i32
    %c0_i32_0 = arith.constant 0 : i32
    %2 = arith.cmpi ne, %1, %c0_i32_0 : i32
    scf.if %2 {
      %c0_12 = arith.constant 0 : index
      %c0_13 = arith.constant 0 : index
      %c0_14 = arith.constant 0 : index
      %32 = vector.load %arg2[%c0_12, %c0_13, %c0_14] : memref<1x32x256xf32, #tpu.memory_space<vmem>>, vector<1x32x256xf32>
      %33 = vector.shape_cast %32 : vector<1x32x256xf32> to vector<32x256xf32>
      %34 = arith.truncf %33 : vector<32x256xf32> to vector<32x256xbf16>
      %c0_15 = arith.constant 0 : index
      %c0_16 = arith.constant 0 : index
      %35 = vector.load %arg3[%c0_15, %c0_16] : memref<65x32xbf16, #tpu.memory_space<vmem>>, vector<65x32xbf16>
      %cst_17 = arith.constant dense<0.000000e+00> : vector<65x256xf32>
      %36 = tpu.matmul %35, %34, %cst_17 {dimension_numbers = #tpu.dot_dimension_numbers<[1], [0], [0], [1], [0, 0, 1, 1], [], []>} : vector<65x32xbf16>, vector<32x256xbf16>, vector<65x256xf32> -> vector<65x256xf32>
      %c0_18 = arith.constant 0 : index
      %c0_19 = arith.constant 0 : index
      %37 = vector.load %arg4[%c0_18, %c0_19] : memref<65x1xf32, #tpu.memory_space<vmem>>, vector<65x1xf32>
      %38 = vector.broadcast %37 : vector<65x1xf32> to vector<65x256xf32>
      %39 = arith.addf %36, %38 : vector<65x256xf32>
      %40 = arith.truncf %39 : vector<65x256xf32> to vector<65x256xbf16>
      %c0_20 = arith.constant 0 : index
      %c0_21 = arith.constant 0 : index
      %41 = vector.load %arg7[%c0_20, %c0_21] : memref<65x256xbf16, #tpu.memory_space<vmem>>, vector<65x256xbf16>
      tpu.vector_store %arg7[%c0_20, %c0_21], %40 {strides = array<i32>} : memref<65x256xbf16, #tpu.memory_space<vmem>>, vector<65x256xbf16>,
    } else {
    }
    %c256_i32 = arith.constant 256 : i32
    %3 = arith.muli %arg1, %c256_i32 : i32
    %4 = tpu.assume_multiple %3, 256 : i32
    %c0 = arith.constant 0 : index
    %5 = arith.index_cast %4 : i32 to index
    %6 = vector.load %arg7[%c0, %5] : memref<65x256xbf16, #tpu.memory_space<vmem>>, vector<16x256xbf16>
    %c16 = arith.constant 16 : index
    %c0_1 = arith.constant 0 : index
    %7 = vector.load %arg7[%c16, %c0_1] : memref<65x256xbf16, #tpu.memory_space<vmem>>, vector<16x256xbf16>
    %c32 = arith.constant 32 : index
    %c0_2 = arith.constant 0 : index
    %8 = vector.load %arg7[%c32, %c0_2] : memref<65x256xbf16, #tpu.memory_space<vmem>>, vector<33x256xbf16>
    %cst = arith.constant dense<0.000000e+00> : vector<256x256xf32>
    %9 = tpu.matmul %6, %7, %cst {dimension_numbers = #tpu.dot_dimension_numbers<[0], [0], [1], [1], [0, 1, 1, 1], [], []>} : vector<16x256xbf16>, vector<16x256xbf16>, vector<256x256xf32> -> vector<256x256xf32>
    %cst_3 = arith.constant dense<0xFF800000> : vector<256xf32>
    %10 = vector.multi_reduction <maximumf>, %9, %cst_3 [1] : vector<256x256xf32> to vector<256xf32>
    %11 = vector.shape_cast %10 : vector<256xf32> to vector<256x1xf32>
    %12 = vector.broadcast %11 : vector<256x1xf32> to vector<256x256xf32>
    %13 = arith.subf %9, %12 : vector<256x256xf32>
    %14 = math.exp %13 : vector<256x256xf32>
    %15 = arith.truncf %14 : vector<256x256xf32> to vector<256x256xbf16>
    %cst_4 = arith.constant dense<0.000000e+00> : vector<33x256xf32>
    %16 = tpu.matmul %8, %15, %cst_4 {dimension_numbers = #tpu.dot_dimension_numbers<[1], [1], [0], [0], [0, 0, 1, 0], [], []>} : vector<33x256xbf16>, vector<256x256xbf16>, vector<33x256xf32> -> vector<33x256xf32>
    %17 = vector.extract_strided_slice %16 {offsets = [32, 0], sizes = [1, 256], strides = [1, 1]} : vector<33x256xf32> to vector<1x256xf32>
    %18 = tpu.reciprocal %17 {approx = true} : vector<1x256xf32> -> vector<1x256xf32>
    %19 = vector.extract_strided_slice %16 {offsets = [0, 0], sizes = [32, 256], strides = [1, 1]} : vector<33x256xf32> to vector<32x256xf32>
    %20 = vector.broadcast %18 : vector<1x256xf32> to vector<32x256xf32>
    %21 = arith.mulf %19, %20 : vector<32x256xf32>
    %c0_5 = arith.constant 0 : index
    %c0_6 = arith.constant 0 : index
    %22 = arith.index_cast %4 : i32 to index
    %23 = vector.load %arg2[%c0_5, %c0_6, %22] : memref<1x32x256xf32, #tpu.memory_space<vmem>>, vector<1x32x256xf32>
    %24 = vector.shape_cast %23 : vector<1x32x256xf32> to vector<32x256xf32>
    %c0_7 = arith.constant 0 : index
    %c0_8 = arith.constant 0 : index
    %25 = memref.load %arg5[%c0_7, %c0_8] : memref<1x1xf32, #tpu.memory_space<smem>>
    %26 = vector.broadcast %25 : f32 to vector<32x256xf32>
    %27 = arith.mulf %26, %21 : vector<32x256xf32>
    %28 = arith.addf %27, %24 : vector<32x256xf32>
    %c0_9 = arith.constant 0 : index
    %c0_10 = arith.constant 0 : index
    %c0_11 = arith.constant 0 : index
    %29 = vector.load %arg6[%c0_9, %c0_10, %c0_11] : memref<1x32x256xf32, #tpu.memory_space<vmem>>, vector<1x32x256xf32>
    %30 = vector.shape_cast %29 : vector<1x32x256xf32> to vector<32x256xf32>
    %31 = vector.shape_cast %28 : vector<32x256xf32> to vector<1x32x256xf32>
    tpu.vector_store %arg6[%c0_9, %c0_10, %c0_11], %31 {strides = array<i32>} : memref<1x32x256xf32, #tpu.memory_space<vmem>>, vector<1x32x256xf32>,
    return
  }
  func.func @transform_0(%arg0: i32, %arg1: i32) -> (i32, i32, i32) {
    %c0_i32 = arith.constant 0 : i32
    %c0_i32_0 = arith.constant 0 : i32
    %c0_i32_1 = arith.constant 0 : i32
    return %arg0, %c0_i32, %c0_i32_0 : i32, i32, i32
  }
  func.func @transform_1(%arg0: i32, %arg1: i32) -> (i32, i32) {
    %c0_i32 = arith.constant 0 : i32
    %c0_i32_0 = arith.constant 0 : i32
    %c0_i32_1 = arith.constant 0 : i32
    return %c0_i32, %c0_i32_0 : i32, i32
  }
  func.func @transform_2(%arg0: i32, %arg1: i32) -> (i32, i32) {
    %c0_i32 = arith.constant 0 : i32
    %c0_i32_0 = arith.constant 0 : i32
    %c0_i32_1 = arith.constant 0 : i32
    return %c0_i32, %c0_i32_0 : i32, i32
  }
  func.func @transform_3(%arg0: i32, %arg1: i32) -> (i32, i32) {
    %c0_i32 = arith.constant 0 : i32
    %c0_i32_0 = arith.constant 0 : i32
    %c0_i32_1 = arith.constant 0 : i32
    return %c0_i32, %c0_i32_0 : i32, i32
  }
  func.func @transform_4(%arg0: i32, %arg1: i32) -> (i32, i32, i32) {
    %c0_i32 = arith.constant 0 : i32
    %c0_i32_0 = arith.constant 0 : i32
    return %arg0, %c0_i32, %arg1 : i32, i32, i32
  }
}

</mosaic_0001>

<llo_original>
// kernel: self_attn_forward.1
$region0: #{self_attn_forward.1}
  #allocation0 [shape = 'u32[]', space=smem, size = 0x4, offset = 0x4, fixed_abs, tag = 'smem constant byte address 0x4 - core index']
  #allocation1 [shape = 'u32[144,128]{1,0:T(1,128)}', space=vmem, size = 0x12000, scoped, tag = 'internal scratch']
  #allocation2 [shape = 'bf16[65,256]{1,0:T(8,128)(2,1)}', space=vmem, size = 0x9000, scoped, tag = 'scratch operand']
  #allocation3 [shape = 'f32[1,1]{1,0:T(1,128)S(6)}', space=smem, size = 0x200, scoped, tag = 'scoped memory for self_attn_forward.1']
  %s0 = inlined_call_operand.vmem [shape: f32[2,32,256], index: 0, kind: input, shape index: {}]
  %s1 = inlined_call_operand.vmem [shape: bf16[65,32], index: 1, kind: input, shape index: {}]
  %s2 = inlined_call_operand.vmem [shape: f32[65,1], index: 2, kind: input, shape index: {}]
  %s3 = inlined_call_operand.<no memory space> [shape: f32[1,1], index: 3, kind: input, shape index: {}]
  %s4 = inlined_call_operand.vmem [shape: f32[2,32,256], index: 4, kind: output, shape index: {}]
  %s5 = sld [smem:[#allocation0]]
  $region53: #{self_attn_forward.1} parent=0
    _
  %s7 = ssub.s32 1, %s5
  %s8 = scalar_select 0, %s7, %s5
  %9 = sst [smem:[#allocation3]] %s3
  loop: start=0, step=1, limit=4
  $region2: #{self_attn_forward.1} parent=0 // loop_pre_header
    _
  $region3: #{self_attn_forward.1} parent=0 // loop_header
    %s11 = sphi 0, %s15
    %p12 = scmp.ge.s32.totalorder %s11, 4
    %s18 = sphi 0, %s30
    %s19 = sphi 0, %s26
    %s20 = sphi 0, %s18
    %s21 = sphi 0, %s19
    %s22 = sphi 0, %s20
    %s23 = sphi 0, %s21
    %s33 = sphi 0, %s35
    %s36 = sphi 0, %s33
    %s37 = sphi 0, %s36
    %s53 = sphi 0, %s37
    %s57 = sphi 0, %s57
    %s59 = sphi 0, %s57
    %s60 = sphi 0, %s59
    %s74 = sphi 0, %s60
    %s78 = sphi 0, %s78
    %s80 = sphi 0, %s78
    %s81 = sphi 0, %s80
    %s95 = sphi 0, %s81
    %s99 = sphi 0, %s99
    %s101 = sphi 0, %s99
    %s102 = sphi 0, %s101
    %s116 = sphi 0, %s102
    %s124 = sphi 0, %s126
    %s127 = sphi 0, %s124
    %s128 = sphi 0, %s127
    %s144 = sphi 0, %s128
  $region4: #{self_attn_forward.1} parent=0 // loop_header_branch
    %14 = sbr.rel (%p12) target = $region8
  $region5: #{self_attn_forward.1} parent=0 // loop_body
    %s16 = ssub.s32 %s11, 1
    %s17 = ssub.s32 %s11, 2
    %s24 = sadd.s32 1, %s19
    %p25 = scmp.ge.s32.totalorder %s24, 1
    %s26 = scalar_select %p25, 0, %s24
    %s27 = sadd.s32 1, %s18
    %s28 = scalar_select %p25, %s27, %s18
    %p29 = scmp.ge.s32.totalorder %s28, 2
    %s30 = scalar_select %p29, 0, %s28
    %s31 = ssub.s32 %s18, %s30
    %p32 = scmp.eq.s32.totalorder %s31, 0
    %s34 = sadd.s32 %s33, 1
    %s35 = scalar_select %p32, %s33, %s34
    %p38 = pneg %p32
    %p39 = scmp.eq.s32.totalorder %s11, 1
    %p40 = por %p38, %p39
    %p41 = scmp.ne.s32.totalorder %s33, %s36
    %p42 = scmp.eq.s32.totalorder %s11, 0
    %p43 = por %p41, %p42
    %p44 = scmp.ne.s32.totalorder %s33, %s36
    %p45 = scmp.eq.s32.totalorder %s16, 1
    %p46 = por %p44, %p45
    %p47 = scmp.ne.s32.totalorder %s36, %s37
    %p48 = scmp.eq.s32.totalorder %s16, 0
    %p49 = por %p47, %p48
    %p50 = scmp.ne.s32.totalorder %s36, %s37
    %p51 = scmp.eq.s32.totalorder %s17, 1
    %p52 = por %p50, %p51
    %p54 = scmp.ne.s32.totalorder %s37, %s53
    %p55 = scmp.eq.s32.totalorder %s17, 0
    %p56 = por %p54, %p55
    %s58 = sadd.s32 %s57, 1
    %p61 = scmp.eq.s32.totalorder %s11, 1
    %p62 = scmp.ne.s32.totalorder %s57, %s59
    %p63 = scmp.eq.s32.totalorder %s11, 0
    %p64 = por %p62, %p63
    %p65 = scmp.ne.s32.totalorder %s57, %s59
    %p66 = scmp.eq.s32.totalorder %s16, 1
    %p67 = por %p65, %p66
    %p68 = scmp.ne.s32.totalorder %s59, %s60
    %p69 = scmp.eq.s32.totalorder %s16, 0
    %p70 = por %p68, %p69
    %p71 = scmp.ne.s32.totalorder %s59, %s60
    %p72 = scmp.eq.s32.totalorder %s17, 1
    %p73 = por %p71, %p72
    %p75 = scmp.ne.s32.totalorder %s60, %s74
    %p76 = scmp.eq.s32.totalorder %s17, 0
    %p77 = por %p75, %p76
    %s79 = sadd.s32 %s78, 1
    %p82 = scmp.eq.s32.totalorder %s11, 1
    %p83 = scmp.ne.s32.totalorder %s78, %s80
    %p84 = scmp.eq.s32.totalorder %s11, 0
    %p85 = por %p83, %p84
    %p86 = scmp.ne.s32.totalorder %s78, %s80
    %p87 = scmp.eq.s32.totalorder %s16, 1
    %p88 = por %p86, %p87
    %p89 = scmp.ne.s32.totalorder %s80, %s81
    %p90 = scmp.eq.s32.totalorder %s16, 0
    %p91 = por %p89, %p90
    %p92 = scmp.ne.s32.totalorder %s80, %s81
    %p93 = scmp.eq.s32.totalorder %s17, 1
    %p94 = por %p92, %p93
    %p96 = scmp.ne.s32.totalorder %s81, %s95
    %p97 = scmp.eq.s32.totalorder %s17, 0
    %p98 = por %p96, %p97
    %s100 = sadd.s32 %s99, 1
    %p103 = scmp.eq.s32.totalorder %s11, 1
    %p104 = scmp.ne.s32.totalorder %s99, %s101
    %p105 = scmp.eq.s32.totalorder %s11, 0
    %p106 = por %p104, %p105
    %p107 = scmp.ne.s32.totalorder %s99, %s101
    %p108 = scmp.eq.s32.totalorder %s16, 1
    %p109 = por %p107, %p108
    %p110 = scmp.ne.s32.totalorder %s101, %s102
    %p111 = scmp.eq.s32.totalorder %s16, 0
    %p112 = por %p110, %p111
    %p113 = scmp.ne.s32.totalorder %s101, %s102
    %p114 = scmp.eq.s32.totalorder %s17, 1
    %p115 = por %p113, %p114
    %p117 = scmp.ne.s32.totalorder %s102, %s116
    %p118 = scmp.eq.s32.totalorder %s17, 0
    %p119 = por %p117, %p118
    %s120 = ssub.s32 %s18, %s30
    %s121 = ssub.s32 %s19, %s26
    %s122 = sor.u32 %s120, %s121
    %p123 = scmp.eq.s32.totalorder %s122, 0
    %s125 = sadd.s32 %s124, 1
    %s126 = scalar_select %p123, %s124, %s125
    %p129 = pneg %p123
    %p130 = scmp.eq.s32.totalorder %s11, 1
    %p131 = por %p129, %p130
    %p132 = scmp.ne.s32.totalorder %s124, %s127
    %p133 = scmp.eq.s32.totalorder %s11, 0
    %p134 = por %p132, %p133
    %p135 = scmp.ne.s32.totalorder %s124, %s127
    %p136 = scmp.eq.s32.totalorder %s16, 1
    %p137 = por %p135, %p136
    %p138 = scmp.ne.s32.totalorder %s127, %s128
    %p139 = scmp.eq.s32.totalorder %s16, 0
    %p140 = por %p138, %p139
    %p141 = scmp.ne.s32.totalorder %s127, %s128
    %p142 = scmp.eq.s32.totalorder %s17, 1
    %p143 = por %p141, %p142
    %p145 = scmp.ne.s32.totalorder %s128, %s144
    %p146 = scmp.eq.s32.totalorder %s17, 0
    %p147 = por %p145, %p146
    %p148 = scmp.le.s32.totalorder 1, %s11
    %p149 = scmp.lt.s32.totalorder %s11, 3
    %p150 = pnand %p148, %p149
    %p151 = pneg %p150
    // Predicated region
    $region9: #{self_attn_forward.1} parent=5 // pred_check
      _
    $region10: #{self_attn_forward.1} parent=5 // pred_check_branch
      %153 = sbr.rel (%p150) target = $region12
    $region11: #{self_attn_forward.1} parent=5 // pred_region
      %s154 = ssub.s32 %s11, 1
      // Predicated region
      $region13: #{self_attn_forward.1} parent=11 // pred_check
        %p155 = pneg %p70
      $region14: #{self_attn_forward.1} parent=11 // pred_check_branch
        %157 = sbr.rel (%p155) target = $region16
      $region15: #{self_attn_forward.1} parent=11 // pred_region
        _
      $region16: #{self_attn_forward.1} parent=11 // pred_fallthru
        _
      // Predicated region
      $region17: #{self_attn_forward.1} parent=11 // pred_check
        %p158 = pneg %p91
      $region18: #{self_attn_forward.1} parent=11 // pred_check_branch
        %160 = sbr.rel (%p158) target = $region20
      $region19: #{self_attn_forward.1} parent=11 // pred_region
        _
      $region20: #{self_attn_forward.1} parent=11 // pred_fallthru
        _
      // Predicated region
      $region21: #{self_attn_forward.1} parent=11 // pred_check
        %p161 = pneg %p112
      $region22: #{self_attn_forward.1} parent=11 // pred_check_branch
        %163 = sbr.rel (%p161) target = $region24
      $region23: #{self_attn_forward.1} parent=11 // pred_region
        _
      $region24: #{self_attn_forward.1} parent=11 // pred_fallthru
        _
    $region12: #{self_attn_forward.1} parent=5 // pred_fallthru
      _
    %p164 = scmp.lt.s32.totalorder %s11, 2
    // Predicated region
    $region25: #{self_attn_forward.1} parent=5 // pred_check
      %p165 = pneg %p164
    $region26: #{self_attn_forward.1} parent=5 // pred_check_branch
      %167 = sbr.rel (%p165) target = $region28
    $region27: #{self_attn_forward.1} parent=5 // pred_region
      // Predicated region
      $region29: #{self_attn_forward.1} parent=27 // pred_check
        %p168 = pneg %p43
      $region30: #{self_attn_forward.1} parent=27 // pred_check_branch
        %170 = sbr.rel (%p168) target = $region32
      $region31: #{self_attn_forward.1} parent=27 // pred_region
        %p171 = scmp.lt.s32.totalorder %s18, 1
        %s172 = scalar_select %p171, %s18, 1
        %s173 = smul.addr %s172, 8
        %s174 = smul.addr %s173, 8
        %s175 = scalar_lea.vmem %s0, %s174
      $region32: #{self_attn_forward.1} parent=27 // pred_fallthru
        _
    $region28: #{self_attn_forward.1} parent=5 // pred_fallthru
      _
    %p176 = scmp.le.s32.totalorder 1, %s11
    %p177 = scmp.lt.s32.totalorder %s11, 3
    %p178 = pnand %p176, %p177
    %p179 = pneg %p178
    // Predicated region
    $region33: #{self_attn_forward.1} parent=5 // pred_check
      _
    $region34: #{self_attn_forward.1} parent=5 // pred_check_branch
      %181 = sbr.rel (%p178) target = $region36
    $region35: #{self_attn_forward.1} parent=5 // pred_region
      %s182 = ssub.s32 %s11, 1
      %p183 = scmp.lt.s32.totalorder %s20, 1
      %s184 = scalar_select %p183, %s20, 1
      %s185 = smul.addr %s184, 8
      %s186 = smul.addr %s185, 8
      %s187 = scalar_lea.vmem %s0, %s186
      %p188 = pneg %p49
      %p189 = pneg %p46
      %p190 = pneg %p70
      %p191 = pneg %p67
      %p192 = pneg %p91
      %p193 = pneg %p88
      %p194 = pneg %p112
      %p195 = pneg %p109
      %p196 = pneg %p140
      %p197 = pneg %p137
      %s198 = smul.u32 2, %s21
      %p199 = scmp.lt.s32.totalorder %s20, 1
      %s200 = scalar_select %p199, %s20, 1
      %p201 = scmp.lt.s32.totalorder %s198, 1
      %s202 = scalar_select %p201, %s198, 1
      %s203 = smul.addr %s200, 8
      %s204 = sadd.s32 %s202, %s203
      %s205 = smul.addr %s204, 8
      %s206 = scalar_lea.vmem %s4, %s205
      %p207 = scmp.lt.s32.totalorder %s20, 1
      %s208 = scalar_select %p207, %s20, 1
      %s209 = smul.addr %s208, 8
      %s210 = smul.addr %s209, 8
      %s211 = scalar_lea.vmem %s0, %s210
      %s212 = smul.u32 2, %s21
      %p213 = scmp.lt.s32.totalorder %s20, 1
      %s214 = scalar_select %p213, %s20, 1
      %p215 = scmp.lt.s32.totalorder %s212, 1
      %s216 = scalar_select %p215, %s212, 1
      %s217 = smul.addr %s214, 8
      %s218 = sadd.s32 %s216, %s217
      %s219 = smul.addr %s218, 8
      %s220 = scalar_lea.vmem %s4, %s219
      %s221 = smul.u32 2, %s21
      %p223 = scmp.eq.s32.totalorder %s21, 0
      // Predicated region
      $region37: #{self_attn_forward.1} parent=35 // pred_check
        %p224 = pneg %p223
      $region38: #{self_attn_forward.1} parent=35 // pred_check_branch
        %226 = sbr.rel (%p224) target = $region40
      $region39: #{self_attn_forward.1} parent=35 // pred_region
        %v227 = vld [vmem:[%s211] sm:$0xff]
        %v228 = vld [vmem:[%s211 + $0x8] sm:$0xff]
        %v229 = vld [vmem:[%s211 + $0x10] sm:$0xff]
        %v230 = vld [vmem:[%s211 + $0x18] sm:$0xff]
        %v231 = vld [vmem:[%s211 + $0x20] sm:$0xff]
        %v232 = vld [vmem:[%s211 + $0x28] sm:$0xff]
        %v233 = vld [vmem:[%s211 + $0x30] sm:$0xff]
        %v234 = vld [vmem:[%s211 + $0x38] sm:$0xff]
        %v235 = vpack.c.bf16 %v229, %v227
        %v236 = vpack.c.bf16 %v230, %v228
        %v237 = vpack.c.bf16 %v233, %v231
        %v238 = vpack.c.bf16 %v234, %v232
        %v239 = vld [vmem:[%s1] sm:$0xf]
        %v240 = vld [vmem:[%s1 + $0x4] sm:$0xf]
        %v241 = vld [vmem:[%s1 + $0x8] sm:$0xf]
        %v242 = vld [vmem:[%s1 + $0xc] sm:$0xf]
        %v243 = vld [vmem:[%s1 + $0x10] sm:$0xf]
        %v244 = vld [vmem:[%s1 + $0x14] sm:$0xf]
        %v245 = vld [vmem:[%s1 + $0x18] sm:$0xf]
        %v246 = vld [vmem:[%s1 + $0x1c] sm:$0xf]
        %v247 = vld [vmem:[%s1 + $0x20] sm:$0x1]
        %v248 = vld [vmem:[%s2] sm:$0xff]
        %v249 = vld [vmem:[%s2 + $0x8] sm:$0xff]
        %v250 = vld [vmem:[%s2 + $0x10] sm:$0xff]
        %v251 = vld [vmem:[%s2 + $0x18] sm:$0xff]
        %v252 = vld [vmem:[%s2 + $0x20] sm:$0xff]
        %v253 = vld [vmem:[%s2 + $0x28] sm:$0xff]
        %v254 = vld [vmem:[%s2 + $0x30] sm:$0xff]
        %v255 = vld [vmem:[%s2 + $0x38] sm:$0xff]
        %v256 = vld [vmem:[%s2 + $0x40] sm:$0x1]
        %258 = vset.pattern.permute.xlu0 0
        %259 = vperm.xlu0 %258, %v248
        %v260 = vpop.permute.xlu0 %259
        %263 = vset.pattern.permute.xlu0 0
        %264 = vperm.xlu0 %263, %v249
        %v265 = vpop.permute.xlu0 %264
        %268 = vset.pattern.permute.xlu0 0
        %269 = vperm.xlu0 %268, %v250
        %v270 = vpop.permute.xlu0 %269
        %273 = vset.pattern.permute.xlu0 0
        %274 = vperm.xlu0 %273, %v251
        %v275 = vpop.permute.xlu0 %274
        %278 = vset.pattern.permute.xlu0 0
        %279 = vperm.xlu0 %278, %v252
        %v280 = vpop.permute.xlu0 %279
        %283 = vset.pattern.permute.xlu0 0
        %284 = vperm.xlu0 %283, %v253
        %v285 = vpop.permute.xlu0 %284
        %288 = vset.pattern.permute.xlu0 0
        %289 = vperm.xlu0 %288, %v254
        %v290 = vpop.permute.xlu0 %289
        %293 = vset.pattern.permute.xlu0 0
        %294 = vperm.xlu0 %293, %v255
        %v295 = vpop.permute.xlu0 %294
        %298 = vset.pattern.permute.xlu0 0
        %299 = vperm.xlu0 %298, %v256
        %v300 = vpop.permute.xlu0 %299
        %v311 = vunpack.c.l.b16 %v239
        %v312 = vunpack.c.l.b16 %v240
        %v313 = vunpack.c.l.b16 %v241
        %v314 = vunpack.c.l.b16 %v242
        %v315 = vunpack.c.l.b16 %v243
        %v316 = vunpack.c.l.b16 %v244
        %v317 = vunpack.c.l.b16 %v245
        %v318 = vunpack.c.l.b16 %v246
        %v319 = vunpack.c.l.b16 %v247
        %v320 = vpack.c.b16 %v312, %v311
        %v321 = vpack.c.b16 %v314, %v313
        %v322 = vpack.c.b16 %v316, %v315
        %v323 = vpack.c.b16 %v318, %v317
        %v324 = vpack.c.b16 %v319, %v319
        %vm325 = vcmask 261120
        %v327 = vsel %vm325, %v320, 0
        %v330 = vsel %vm325, %v321, 0
        %v333 = vsel %vm325, %v322, 0
        %v336 = vsel %vm325, %v323, 0
        %v339 = vsel %vm325, %v324, 0
        %341 = vmatprep.subr.bf16.mxu0 0
        %342 = vmatpush1.bf16.msra.mxu0 0
        %343 = vmatprep.subr.bf16.mxu0 0
        %344 = vmatpush1.bf16.msra.mxu0 0
        %345 = vmatprep.subr.bf16.mxu0 0
        %346 = vmatpush1.bf16.msra.mxu0 0
        %347 = vmatprep.subr.bf16.mxu0 0
        %348 = vmatpush1.bf16.msra.mxu0 0
        %349 = vmatprep.subr.bf16.mxu0 0
        %350 = vmatpush1.bf16.msra.mxu0 0
        %351 = vmatprep.subr.bf16.mxu0 0
        %352 = vmatpush1.bf16.msra.mxu0 0
        %353 = vmatprep.subr.bf16.mxu0 %v238
        %354 = vmatpush1.bf16.msra.mxu0 %v237
        %355 = vmatprep.subr.bf16.mxu0 %v236
        %356 = vmatpush1.bf16.msra.mxu0 %v235
        %357 = vmatprep.subr.bf16.mxu0 0
        %358 = vmatpush2.bf16.msra.mxu0 0
        %359 = vmatprep.subr.bf16.mxu0 0
        %360 = vmatpush2.bf16.msra.mxu0 0
        %361 = vmatprep.subr.bf16.mxu0 0
        %362 = vmatpush2.bf16.msra.mxu0 0
        %363 = vmatprep.subr.bf16.mxu0 0
        %364 = vmatpush2.bf16.msra.mxu0 0
        %365 = vmatprep.subr.bf16.mxu0 0
        %366 = vmatpush2.bf16.msra.mxu0 0
        %367 = vmatprep.subr.bf16.mxu0 0
        %368 = vmatpush2.bf16.msra.mxu0 0
        %369 = vmatprep.subr.bf16.mxu0 0
        %370 = vmatpush2.bf16.msra.mxu0 0
        %371 = vmatprep.subr.bf16.mxu0 0
        %372 = vmatpush2.bf16.msra.mxu0 0
        %373 = vmatprep.mubr.bf16.mxu0 0
        %374 = vmatmul.mubr.bf16.gmra.mxu0 %v327
        %v375 = vpop.f32.mrf.mxu0
        %v376 = vadd.f32 %v260, %v375
        %v377 = vpop.f32.mrf.mxu0
        %v378 = vadd.f32 %v260, %v377
        %v379 = vpop.f32.mrf.mxu0
        %v380 = vadd.f32 %v265, %v379
        %v381 = vpop.f32.mrf.mxu0
        %v382 = vadd.f32 %v265, %v381
        %383 = vmatprep.mubr.bf16.mxu0 0
        %384 = vmatmul.mubr.bf16.gmra.mxu0 %v330
        %v385 = vpop.f32.mrf.mxu0
        %v386 = vadd.f32 %v270, %v385
        %v387 = vpop.f32.mrf.mxu0
        %v388 = vadd.f32 %v270, %v387
        %v389 = vpop.f32.mrf.mxu0
        %v390 = vadd.f32 %v275, %v389
        %v391 = vpop.f32.mrf.mxu0
        %v392 = vadd.f32 %v275, %v391
        %393 = vmatprep.mubr.bf16.mxu0 0
        %394 = vmatmul.mubr.bf16.gmra.mxu0 %v333
        %v395 = vpop.f32.mrf.mxu0
        %v396 = vadd.f32 %v280, %v395
        %v397 = vpop.f32.mrf.mxu0
        %v398 = vadd.f32 %v280, %v397
        %v399 = vpop.f32.mrf.mxu0
        %v400 = vadd.f32 %v285, %v399
        %v401 = vpop.f32.mrf.mxu0
        %v402 = vadd.f32 %v285, %v401
        %403 = vmatprep.mubr.bf16.mxu0 0
        %404 = vmatmul.mubr.bf16.gmra.mxu0 %v336
        %v405 = vpop.f32.mrf.mxu0
        %v406 = vadd.f32 %v290, %v405
        %v407 = vpop.f32.mrf.mxu0
        %v408 = vadd.f32 %v290, %v407
        %v409 = vpop.f32.mrf.mxu0
        %v410 = vadd.f32 %v295, %v409
        %v411 = vpop.f32.mrf.mxu0
        %v412 = vadd.f32 %v295, %v411
        %413 = vmatprep.mubr.bf16.mxu0 0
        %414 = vmatmul.mubr.bf16.gmra.mxu0 %v339
        %v415 = vpop.f32.mrf.mxu0
        %v416 = vadd.f32 %v300, %v415
        %v417 = vpop.f32.mrf.mxu0
        %v418 = vadd.f32 %v300, %v417
        %v419 = vpop.f32.mrf.mxu0
        %v420 = vpop.f32.mrf.mxu0
        %421 = vdwg.mxu0
        %v422 = vpack.c.bf16 %v380, %v376
        %v423 = vpack.c.bf16 %v382, %v378
        %v424 = vpack.c.bf16 %v390, %v386
        %v425 = vpack.c.bf16 %v392, %v388
        %v426 = vpack.c.bf16 %v400, %v396
        %v427 = vpack.c.bf16 %v402, %v398
        %v428 = vpack.c.bf16 %v410, %v406
        %v429 = vpack.c.bf16 %v412, %v408
        %v430 = vpack.c.bf16 %v416, %v416
        %v431 = vpack.c.bf16 %v418, %v418
        %v442 = vunpack.c.l.b16 %v422
        %v443 = vunpack.c.l.b16 %v423
        %v444 = vunpack.c.h.b16 %v422
        %v445 = vunpack.c.h.b16 %v423
        %v446 = vunpack.c.l.b16 %v424
        %v447 = vunpack.c.l.b16 %v425
        %v448 = vunpack.c.h.b16 %v424
        %v449 = vunpack.c.h.b16 %v425
        %v450 = vunpack.c.l.b16 %v426
        %v451 = vunpack.c.l.b16 %v427
        %v452 = vunpack.c.h.b16 %v426
        %v453 = vunpack.c.h.b16 %v427
        %v454 = vunpack.c.l.b16 %v428
        %v455 = vunpack.c.l.b16 %v429
        %v456 = vunpack.c.h.b16 %v428
        %v457 = vunpack.c.h.b16 %v429
        %v458 = vunpack.c.l.b16 %v430
        %v459 = vunpack.c.l.b16 %v431
        %v460 = vpack.c.b16 %v443, %v442
        %v461 = vpack.c.b16 %v445, %v444
        %v462 = vpack.c.b16 %v447, %v446
        %v463 = vpack.c.b16 %v449, %v448
        %v464 = vpack.c.b16 %v451, %v450
        %v465 = vpack.c.b16 %v453, %v452
        %v466 = vpack.c.b16 %v455, %v454
        %v467 = vpack.c.b16 %v457, %v456
        %v468 = vpack.c.b16 %v459, %v458
        %478 = vst [vmem:[#allocation2] sm:$0xff] %v460
        %479 = vst [vmem:[#allocation2 + $0x8] sm:$0xff] %v461
        %480 = vst [vmem:[#allocation2 + $0x10] sm:$0xff] %v462
        %481 = vst [vmem:[#allocation2 + $0x18] sm:$0xff] %v463
        %482 = vst [vmem:[#allocation2 + $0x20] sm:$0xff] %v464
        %483 = vst [vmem:[#allocation2 + $0x28] sm:$0xff] %v465
        %484 = vst [vmem:[#allocation2 + $0x30] sm:$0xff] %v466
        %485 = vst [vmem:[#allocation2 + $0x38] sm:$0xff] %v467
        %vm486 = vcmask 1040384
        %vm487 = vsmask.f32 256
        %vm488 = vmand %vm486, %vm487
        %vm489 = vcmask 1044484
        %vm490 = vsmask.f32 4352
        %vm491 = vmand %vm489, %vm490
        %vm492 = vmor %vm491, %vm488
        %v493 = vld [vmem:[#allocation2 + $0x40] sm:$0x11]
        %v494 = vsel %vm492, %v468, %v493
        %495 = vst [vmem:[#allocation2 + $0x40] sm:$0x11] %v494
      $region40: #{self_attn_forward.1} parent=35 // pred_fallthru
        _
      %s496 = smul.u32 %s21, 256
      %s497 = sshra.s32 %s496, 7
      %s498 = sand.u32 %s496, 127
      %s499 = smul.addr %s497, 4
      %s500 = scalar_lea.vmem [#allocation2], %s499
      %v501 = vld [vmem:[%s500] sm:$0xff]
      %v502 = vld [vmem:[%s500 + $0x8] sm:$0xff]
      %v503 = vld [vmem:[#allocation2 + $0x10] sm:$0xff]
      %v504 = vld [vmem:[#allocation2 + $0x18] sm:$0xff]
      %v505 = vld [vmem:[#allocation2 + $0x20] sm:$0xff]
      %v506 = vld [vmem:[#allocation2 + $0x28] sm:$0xff]
      %v507 = vld [vmem:[#allocation2 + $0x30] sm:$0xff]
      %v508 = vld [vmem:[#allocation2 + $0x38] sm:$0xff]
      %v509 = vld [vmem:[#allocation2 + $0x40] sm:$0x11]
      %v512 = vunpack.c.l.b16 %v501
      %v513 = vunpack.c.h.b16 %v501
      %v514 = vunpack.c.l.b16 %v502
      %v515 = vunpack.c.h.b16 %v502
      %v516 = vpack.c.b16 %v514, %v512
      %v517 = vpack.c.b16 %v515, %v513
      %520 = vxpose.xlu0.c.b16.start [1/8] %v516, 128
      %521 = vxpose.xlu0.c.b16.cont [2/8] 0, 128
      %522 = vxpose.xlu0.c.b16.cont [3/8] 0, 128
      %523 = vxpose.xlu0.c.b16.cont [4/8] 0, 128
      %524 = vxpose.xlu0.c.b16.cont [5/8] 0, 128
      %525 = vxpose.xlu0.c.b16.cont [6/8] 0, 128
      %526 = vxpose.xlu0.c.b16.cont [7/8] 0, 128
      %527 = vxpose.xlu0.c.b16.end [8/8] 0, 128
      %v528 = vpop.trf.xlu0
      %v529 = vpop.trf.xlu0
      %v530 = vpop.trf.xlu0
      %v531 = vpop.trf.xlu0
      %v532 = vpop.trf.xlu0
      %v533 = vpop.trf.xlu0
      %v534 = vpop.trf.xlu0
      %v535 = vpop.trf.xlu0
      %536 = vxpose.xlu0.c.b16.start [1/8] %v517, 128
      %537 = vxpose.xlu0.c.b16.cont [2/8] 0, 128
      %538 = vxpose.xlu0.c.b16.cont [3/8] 0, 128
      %539 = vxpose.xlu0.c.b16.cont [4/8] 0, 128
      %540 = vxpose.xlu0.c.b16.cont [5/8] 0, 128
      %541 = vxpose.xlu0.c.b16.cont [6/8] 0, 128
      %542 = vxpose.xlu0.c.b16.cont [7/8] 0, 128
      %543 = vxpose.xlu0.c.b16.end [8/8] 0, 128
      %v544 = vpop.trf.xlu0
      %v545 = vpop.trf.xlu0
      %v546 = vpop.trf.xlu0
      %v547 = vpop.trf.xlu0
      %v548 = vpop.trf.xlu0
      %v549 = vpop.trf.xlu0
      %v550 = vpop.trf.xlu0
      %v551 = vpop.trf.xlu0
      %v554 = vunpack.c.l.b16 %v503
      %v555 = vunpack.c.h.b16 %v503
      %v556 = vunpack.c.l.b16 %v504
      %v557 = vunpack.c.h.b16 %v504
      %v558 = vpack.c.b16 %v556, %v554
      %v559 = vpack.c.b16 %v557, %v555
      %vm562 = vcmask 130048
      %v564 = vsel %vm562, %v528, 0
      %v567 = vsel %vm562, %v529, 0
      %v570 = vsel %vm562, %v530, 0
      %v573 = vsel %vm562, %v531, 0
      %v576 = vsel %vm562, %v532, 0
      %v579 = vsel %vm562, %v533, 0
      %v582 = vsel %vm562, %v534, 0
      %v585 = vsel %vm562, %v535, 0
      %v588 = vsel %vm562, %v544, 0
      %v591 = vsel %vm562, %v545, 0
      %v594 = vsel %vm562, %v546, 0
      %v597 = vsel %vm562, %v547, 0
      %v600 = vsel %vm562, %v548, 0
      %v603 = vsel %vm562, %v549, 0
      %v606 = vsel %vm562, %v550, 0
      %v609 = vsel %vm562, %v551, 0
      %611 = vmatprep.subr.bf16.mxu0 0
      %612 = vmatpush1.bf16.msra.mxu0 0
      %613 = vmatprep.subr.bf16.mxu0 0
      %614 = vmatpush1.bf16.msra.mxu0 0
      %615 = vmatprep.subr.bf16.mxu0 0
      %616 = vmatpush1.bf16.msra.mxu0 0
      %617 = vmatprep.subr.bf16.mxu0 0
      %618 = vmatpush1.bf16.msra.mxu0 0
      %619 = vmatprep.subr.bf16.mxu0 0
      %620 = vmatpush1.bf16.msra.mxu0 0
      %621 = vmatprep.subr.bf16.mxu0 0
      %622 = vmatpush1.bf16.msra.mxu0 0
      %623 = vmatprep.subr.bf16.mxu0 0
      %624 = vmatpush1.bf16.msra.mxu0 0
      %625 = vmatprep.subr.bf16.mxu0 %v559
      %626 = vmatpush1.bf16.msra.mxu0 %v558
      %627 = vmatprep.subr.bf16.mxu0 0
      %628 = vmatpush2.bf16.msra.mxu0 0
      %629 = vmatprep.subr.bf16.mxu0 0
      %630 = vmatpush2.bf16.msra.mxu0 0
      %631 = vmatprep.subr.bf16.mxu0 0
      %632 = vmatpush2.bf16.msra.mxu0 0
      %633 = vmatprep.subr.bf16.mxu0 0
      %634 = vmatpush2.bf16.msra.mxu0 0
      %635 = vmatprep.subr.bf16.mxu0 0
      %636 = vmatpush2.bf16.msra.mxu0 0
      %637 = vmatprep.subr.bf16.mxu0 0
      %638 = vmatpush2.bf16.msra.mxu0 0
      %639 = vmatprep.subr.bf16.mxu0 0
      %640 = vmatpush2.bf16.msra.mxu0 0
      %641 = vmatprep.subr.bf16.mxu0 0
      %642 = vmatpush2.bf16.msra.mxu0 0
      %643 = vmatprep.mubr.bf16.mxu0 0
      %644 = vmatmul.mubr.bf16.gmra.mxu0 %v564
      %v645 = vpop.f32.mrf.mxu0
      %v646 = vadd.f32 0.0, %v645
      %v647 = vpop.f32.mrf.mxu0
      %v648 = vadd.f32 0.0, %v647
      %v649 = vpop.f32.mrf.mxu0
      %v650 = vadd.f32 0.0, %v649
      %v651 = vpop.f32.mrf.mxu0
      %v652 = vadd.f32 0.0, %v651
      %653 = vmatprep.mubr.bf16.mxu0 0
      %654 = vmatmul.mubr.bf16.gmra.mxu0 %v567
      %v655 = vpop.f32.mrf.mxu0
      %v656 = vadd.f32 0.0, %v655
      %v657 = vpop.f32.mrf.mxu0
      %v658 = vadd.f32 0.0, %v657
      %v659 = vpop.f32.mrf.mxu0
      %v660 = vadd.f32 0.0, %v659
      %v661 = vpop.f32.mrf.mxu0
      %v662 = vadd.f32 0.0, %v661
      %663 = vmatprep.mubr.bf16.mxu0 0
      %664 = vmatmul.mubr.bf16.gmra.mxu0 %v570
      %v665 = vpop.f32.mrf.mxu0
      %v666 = vadd.f32 0.0, %v665
      %v667 = vpop.f32.mrf.mxu0
      %v668 = vadd.f32 0.0, %v667
      %v669 = vpop.f32.mrf.mxu0
      %v670 = vadd.f32 0.0, %v669
      %v671 = vpop.f32.mrf.mxu0
      %v672 = vadd.f32 0.0, %v671
      %673 = vmatprep.mubr.bf16.mxu0 0
      %674 = vmatmul.mubr.bf16.gmra.mxu0 %v573
      %v675 = vpop.f32.mrf.mxu0
      %v676 = vadd.f32 0.0, %v675
      %v677 = vpop.f32.mrf.mxu0
      %v678 = vadd.f32 0.0, %v677
      %v679 = vpop.f32.mrf.mxu0
      %v680 = vadd.f32 0.0, %v679
      %v681 = vpop.f32.mrf.mxu0
      %v682 = vadd.f32 0.0, %v681
      %683 = vmatprep.mubr.bf16.mxu0 0
      %684 = vmatmul.mubr.bf16.gmra.mxu0 %v576
      %v685 = vpop.f32.mrf.mxu0
      %v686 = vadd.f32 0.0, %v685
      %v687 = vpop.f32.mrf.mxu0
      %v688 = vadd.f32 0.0, %v687
      %v689 = vpop.f32.mrf.mxu0
      %v690 = vadd.f32 0.0, %v689
      %v691 = vpop.f32.mrf.mxu0
      %v692 = vadd.f32 0.0, %v691
      %693 = vmatprep.mubr.bf16.mxu0 0
      %694 = vmatmul.mubr.bf16.gmra.mxu0 %v579
      %v695 = vpop.f32.mrf.mxu0
      %v696 = vadd.f32 0.0, %v695
      %v697 = vpop.f32.mrf.mxu0
      %v698 = vadd.f32 0.0, %v697
      %v699 = vpop.f32.mrf.mxu0
      %v700 = vadd.f32 0.0, %v699
      %v701 = vpop.f32.mrf.mxu0
      %v702 = vadd.f32 0.0, %v701
      %703 = vmatprep.mubr.bf16.mxu0 0
      %704 = vmatmul.mubr.bf16.gmra.mxu0 %v582
      %v705 = vpop.f32.mrf.mxu0
      %v706 = vadd.f32 0.0, %v705
      %v707 = vpop.f32.mrf.mxu0
      %v708 = vadd.f32 0.0, %v707
      %v709 = vpop.f32.mrf.mxu0
      %v710 = vadd.f32 0.0, %v709
      %v711 = vpop.f32.mrf.mxu0
      %v712 = vadd.f32 0.0, %v711
      %713 = vmatprep.mubr.bf16.mxu0 0
      %714 = vmatmul.mubr.bf16.gmra.mxu0 %v585
      %v715 = vpop.f32.mrf.mxu0
      %v716 = vadd.f32 0.0, %v715
      %v717 = vpop.f32.mrf.mxu0
      %v718 = vadd.f32 0.0, %v717
      %v719 = vpop.f32.mrf.mxu0
      %v720 = vadd.f32 0.0, %v719
      %v721 = vpop.f32.mrf.mxu0
      %v722 = vadd.f32 0.0, %v721
      %723 = vmatprep.mubr.bf16.mxu0 0
      %724 = vmatmul.mubr.bf16.gmra.mxu0 %v588
      %v725 = vpop.f32.mrf.mxu0
      %v726 = vadd.f32 0.0, %v725
      %v727 = vpop.f32.mrf.mxu0
      %v728 = vadd.f32 0.0, %v727
      %v729 = vpop.f32.mrf.mxu0
      %v730 = vadd.f32 0.0, %v729
      %v731 = vpop.f32.mrf.mxu0
      %v732 = vadd.f32 0.0, %v731
      %733 = vmatprep.mubr.bf16.mxu0 0
      %734 = vmatmul.mubr.bf16.gmra.mxu0 %v591
      %v735 = vpop.f32.mrf.mxu0
      %v736 = vadd.f32 0.0, %v735
      %v737 = vpop.f32.mrf.mxu0
      %v738 = vadd.f32 0.0, %v737
      %v739 = vpop.f32.mrf.mxu0
      %v740 = vadd.f32 0.0, %v739
      %v741 = vpop.f32.mrf.mxu0
      %v742 = vadd.f32 0.0, %v741
      %743 = vmatprep.mubr.bf16.mxu0 0
      %744 = vmatmul.mubr.bf16.gmra.mxu0 %v594
      %v745 = vpop.f32.mrf.mxu0
      %v746 = vadd.f32 0.0, %v745
      %v747 = vpop.f32.mrf.mxu0
      %v748 = vadd.f32 0.0, %v747
      %v749 = vpop.f32.mrf.mxu0
      %v750 = vadd.f32 0.0, %v749
      %v751 = vpop.f32.mrf.mxu0
      %v752 = vadd.f32 0.0, %v751
      %753 = vmatprep.mubr.bf16.mxu0 0
      %754 = vmatmul.mubr.bf16.gmra.mxu0 %v597
      %v755 = vpop.f32.mrf.mxu0
      %v756 = vadd.f32 0.0, %v755
      %v757 = vpop.f32.mrf.mxu0
      %v758 = vadd.f32 0.0, %v757
      %v759 = vpop.f32.mrf.mxu0
      %v760 = vadd.f32 0.0, %v759
      %v761 = vpop.f32.mrf.mxu0
      %v762 = vadd.f32 0.0, %v761
      %763 = vmatprep.mubr.bf16.mxu0 0
      %764 = vmatmul.mubr.bf16.gmra.mxu0 %v600
      %v765 = vpop.f32.mrf.mxu0
      %v766 = vadd.f32 0.0, %v765
      %v767 = vpop.f32.mrf.mxu0
      %v768 = vadd.f32 0.0, %v767
      %v769 = vpop.f32.mrf.mxu0
      %v770 = vadd.f32 0.0, %v769
      %v771 = vpop.f32.mrf.mxu0
      %v772 = vadd.f32 0.0, %v771
      %773 = vmatprep.mubr.bf16.mxu0 0
      %774 = vmatmul.mubr.bf16.gmra.mxu0 %v603
      %v775 = vpop.f32.mrf.mxu0
      %v776 = vadd.f32 0.0, %v775
      %v777 = vpop.f32.mrf.mxu0
      %v778 = vadd.f32 0.0, %v777
      %v779 = vpop.f32.mrf.mxu0
      %v780 = vadd.f32 0.0, %v779
      %v781 = vpop.f32.mrf.mxu0
      %v782 = vadd.f32 0.0, %v781
      %783 = vmatprep.mubr.bf16.mxu0 0
      %784 = vmatmul.mubr.bf16.gmra.mxu0 %v606
      %v785 = vpop.f32.mrf.mxu0
      %v786 = vadd.f32 0.0, %v785
      %v787 = vpop.f32.mrf.mxu0
      %v788 = vadd.f32 0.0, %v787
      %v789 = vpop.f32.mrf.mxu0
      %v790 = vadd.f32 0.0, %v789
      %v791 = vpop.f32.mrf.mxu0
      %v792 = vadd.f32 0.0, %v791
      %793 = vmatprep.mubr.bf16.mxu0 0
      %794 = vmatmul.mubr.bf16.gmra.mxu0 %v609
      %v795 = vpop.f32.mrf.mxu0
      %v796 = vadd.f32 0.0, %v795
      %v797 = vpop.f32.mrf.mxu0
      %v798 = vadd.f32 0.0, %v797
      %v799 = vpop.f32.mrf.mxu0
      %v800 = vadd.f32 0.0, %v799
      %v801 = vpop.f32.mrf.mxu0
      %v802 = vadd.f32 0.0, %v801
      %803 = vdwg.mxu0
      %v804 = vmax.f32 %v646, %v648
      %805 = vmax.xlane.f32.xlu0 %v804
      %v806 = vpop.xlane.xlu0 %805
      %v807 = vmax.f32 %v650, %v652
      %808 = vmax.xlane.f32.xlu0 %v807
      %v809 = vpop.xlane.xlu0 %808
      %v810 = vmax.f32 %v656, %v658
      %811 = vmax.xlane.f32.xlu0 %v810
      %v812 = vpop.xlane.xlu0 %811
      %v813 = vmax.f32 %v660, %v662
      %814 = vmax.xlane.f32.xlu0 %v813
      %v815 = vpop.xlane.xlu0 %814
      %v816 = vmax.f32 %v666, %v668
      %817 = vmax.xlane.f32.xlu0 %v816
      %v818 = vpop.xlane.xlu0 %817
      %v819 = vmax.f32 %v670, %v672
      %820 = vmax.xlane.f32.xlu0 %v819
      %v821 = vpop.xlane.xlu0 %820
      %v822 = vmax.f32 %v676, %v678
      %823 = vmax.xlane.f32.xlu0 %v822
      %v824 = vpop.xlane.xlu0 %823
      %v825 = vmax.f32 %v680, %v682
      %826 = vmax.xlane.f32.xlu0 %v825
      %v827 = vpop.xlane.xlu0 %826
      %v828 = vmax.f32 %v686, %v688
      %829 = vmax.xlane.f32.xlu0 %v828
      %v830 = vpop.xlane.xlu0 %829
      %v831 = vmax.f32 %v690, %v692
      %832 = vmax.xlane.f32.xlu0 %v831
      %v833 = vpop.xlane.xlu0 %832
      %v834 = vmax.f32 %v696, %v698
      %835 = vmax.xlane.f32.xlu0 %v834
      %v836 = vpop.xlane.xlu0 %835
      %v837 = vmax.f32 %v700, %v702
      %838 = vmax.xlane.f32.xlu0 %v837
      %v839 = vpop.xlane.xlu0 %838
      %v840 = vmax.f32 %v706, %v708
      %841 = vmax.xlane.f32.xlu0 %v840
      %v842 = vpop.xlane.xlu0 %841
      %v843 = vmax.f32 %v710, %v712
      %844 = vmax.xlane.f32.xlu0 %v843
      %v845 = vpop.xlane.xlu0 %844
      %v846 = vmax.f32 %v716, %v718
      %847 = vmax.xlane.f32.xlu0 %v846
      %v848 = vpop.xlane.xlu0 %847
      %v849 = vmax.f32 %v720, %v722
      %850 = vmax.xlane.f32.xlu0 %v849
      %v851 = vpop.xlane.xlu0 %850
      %v852 = vmax.f32 %v726, %v728
      %853 = vmax.xlane.f32.xlu0 %v852
      %v854 = vpop.xlane.xlu0 %853
      %v855 = vmax.f32 %v730, %v732
      %856 = vmax.xlane.f32.xlu0 %v855
      %v857 = vpop.xlane.xlu0 %856
      %v858 = vmax.f32 %v736, %v738
      %859 = vmax.xlane.f32.xlu0 %v858
      %v860 = vpop.xlane.xlu0 %859
      %v861 = vmax.f32 %v740, %v742
      %862 = vmax.xlane.f32.xlu0 %v861
      %v863 = vpop.xlane.xlu0 %862
      %v864 = vmax.f32 %v746, %v748
      %865 = vmax.xlane.f32.xlu0 %v864
      %v866 = vpop.xlane.xlu0 %865
      %v867 = vmax.f32 %v750, %v752
      %868 = vmax.xlane.f32.xlu0 %v867
      %v869 = vpop.xlane.xlu0 %868
      %v870 = vmax.f32 %v756, %v758
      %871 = vmax.xlane.f32.xlu0 %v870
      %v872 = vpop.xlane.xlu0 %871
      %v873 = vmax.f32 %v760, %v762
      %874 = vmax.xlane.f32.xlu0 %v873
      %v875 = vpop.xlane.xlu0 %874
      %v876 = vmax.f32 %v766, %v768
      %877 = vmax.xlane.f32.xlu0 %v876
      %v878 = vpop.xlane.xlu0 %877
      %v879 = vmax.f32 %v770, %v772
      %880 = vmax.xlane.f32.xlu0 %v879
      %v881 = vpop.xlane.xlu0 %880
      %v882 = vmax.f32 %v776, %v778
      %883 = vmax.xlane.f32.xlu0 %v882
      %v884 = vpop.xlane.xlu0 %883
      %v885 = vmax.f32 %v780, %v782
      %886 = vmax.xlane.f32.xlu0 %v885
      %v887 = vpop.xlane.xlu0 %886
      %v888 = vmax.f32 %v786, %v788
      %889 = vmax.xlane.f32.xlu0 %v888
      %v890 = vpop.xlane.xlu0 %889
      %v891 = vmax.f32 %v790, %v792
      %892 = vmax.xlane.f32.xlu0 %v891
      %v893 = vpop.xlane.xlu0 %892
      %v894 = vmax.f32 %v796, %v798
      %895 = vmax.xlane.f32.xlu0 %v894
      %v896 = vpop.xlane.xlu0 %895
      %v897 = vmax.f32 %v800, %v802
      %898 = vmax.xlane.f32.xlu0 %v897
      %v899 = vpop.xlane.xlu0 %898
      %v900 = vsub.f32 %v646, %v806
      %v901 = vsub.f32 %v648, %v806
      %v902 = vsub.f32 %v650, %v809
      %v903 = vsub.f32 %v652, %v809
      %v904 = vsub.f32 %v656, %v812
      %v905 = vsub.f32 %v658, %v812
      %v906 = vsub.f32 %v660, %v815
      %v907 = vsub.f32 %v662, %v815
      %v908 = vsub.f32 %v666, %v818
      %v909 = vsub.f32 %v668, %v818
      %v910 = vsub.f32 %v670, %v821
      %v911 = vsub.f32 %v672, %v821
      %v912 = vsub.f32 %v676, %v824
      %v913 = vsub.f32 %v678, %v824
      %v914 = vsub.f32 %v680, %v827
      %v915 = vsub.f32 %v682, %v827
      %v916 = vsub.f32 %v686, %v830
      %v917 = vsub.f32 %v688, %v830
      %v918 = vsub.f32 %v690, %v833
      %v919 = vsub.f32 %v692, %v833
      %v920 = vsub.f32 %v696, %v836
      %v921 = vsub.f32 %v698, %v836
      %v922 = vsub.f32 %v700, %v839
      %v923 = vsub.f32 %v702, %v839
      %v924 = vsub.f32 %v706, %v842
      %v925 = vsub.f32 %v708, %v842
      %v926 = vsub.f32 %v710, %v845
      %v927 = vsub.f32 %v712, %v845
      %v928 = vsub.f32 %v716, %v848
      %v929 = vsub.f32 %v718, %v848
      %v930 = vsub.f32 %v720, %v851
      %v931 = vsub.f32 %v722, %v851
      %v932 = vsub.f32 %v726, %v854
      %v933 = vsub.f32 %v728, %v854
      %v934 = vsub.f32 %v730, %v857
      %v935 = vsub.f32 %v732, %v857
      %v936 = vsub.f32 %v736, %v860
      %v937 = vsub.f32 %v738, %v860
      %v938 = vsub.f32 %v740, %v863
      %v939 = vsub.f32 %v742, %v863
      %v940 = vsub.f32 %v746, %v866
      %v941 = vsub.f32 %v748, %v866
      %v942 = vsub.f32 %v750, %v869
      %v943 = vsub.f32 %v752, %v869
      %v944 = vsub.f32 %v756, %v872
      %v945 = vsub.f32 %v758, %v872
      %v946 = vsub.f32 %v760, %v875
      %v947 = vsub.f32 %v762, %v875
      %v948 = vsub.f32 %v766, %v878
      %v949 = vsub.f32 %v768, %v878
      %v950 = vsub.f32 %v770, %v881
      %v951 = vsub.f32 %v772, %v881
      %v952 = vsub.f32 %v776, %v884
      %v953 = vsub.f32 %v778, %v884
      %v954 = vsub.f32 %v780, %v887
      %v955 = vsub.f32 %v782, %v887
      %v956 = vsub.f32 %v786, %v890
      %v957 = vsub.f32 %v788, %v890
      %v958 = vsub.f32 %v790, %v893
      %v959 = vsub.f32 %v792, %v893
      %v960 = vsub.f32 %v796, %v896
      %v961 = vsub.f32 %v798, %v896
      %v962 = vsub.f32 %v800, %v899
      %v963 = vsub.f32 %v802, %v899
      %v964 = vmul.f32 %v900, 1.442695
      %v965 = vpow.pop %v964
      %v966 = vmul.f32 %v901, 1.442695
      %v967 = vpow.pop %v966
      %v968 = vmul.f32 %v902, 1.442695
      %v969 = vpow.pop %v968
      %v970 = vmul.f32 %v903, 1.442695
      %v971 = vpow.pop %v970
      %v972 = vmul.f32 %v904, 1.442695
      %v973 = vpow.pop %v972
      %v974 = vmul.f32 %v905, 1.442695
      %v975 = vpow.pop %v974
      %v976 = vmul.f32 %v906, 1.442695
      %v977 = vpow.pop %v976
      %v978 = vmul.f32 %v907, 1.442695
      %v979 = vpow.pop %v978
      %v980 = vmul.f32 %v908, 1.442695
      %v981 = vpow.pop %v980
      %v982 = vmul.f32 %v909, 1.442695
      %v983 = vpow.pop %v982
      %v984 = vmul.f32 %v910, 1.442695
      %v985 = vpow.pop %v984
      %v986 = vmul.f32 %v911, 1.442695
      %v987 = vpow.pop %v986
      %v988 = vmul.f32 %v912, 1.442695
      %v989 = vpow.pop %v988
      %v990 = vmul.f32 %v913, 1.442695
      %v991 = vpow.pop %v990
      %v992 = vmul.f32 %v914, 1.442695
      %v993 = vpow.pop %v992
      %v994 = vmul.f32 %v915, 1.442695
      %v995 = vpow.pop %v994
      %v996 = vmul.f32 %v916, 1.442695
      %v997 = vpow.pop %v996
      %v998 = vmul.f32 %v917, 1.442695
      %v999 = vpow.pop %v998
      %v1000 = vmul.f32 %v918, 1.442695
      %v1001 = vpow.pop %v1000
      %v1002 = vmul.f32 %v919, 1.442695
      %v1003 = vpow.pop %v1002
      %v1004 = vmul.f32 %v920, 1.442695
      %v1005 = vpow.pop %v1004
      %v1006 = vmul.f32 %v921, 1.442695
      %v1007 = vpow.pop %v1006
      %v1008 = vmul.f32 %v922, 1.442695
      %v1009 = vpow.pop %v1008
      %v1010 = vmul.f32 %v923, 1.442695
      %v1011 = vpow.pop %v1010
      %v1012 = vmul.f32 %v924, 1.442695
      %v1013 = vpow.pop %v1012
      %v1014 = vmul.f32 %v925, 1.442695
      %v1015 = vpow.pop %v1014
      %v1016 = vmul.f32 %v926, 1.442695
      %v1017 = vpow.pop %v1016
      %v1018 = vmul.f32 %v927, 1.442695
      %v1019 = vpow.pop %v1018
      %v1020 = vmul.f32 %v928, 1.442695
      %v1021 = vpow.pop %v1020
      %v1022 = vmul.f32 %v929, 1.442695
      %v1023 = vpow.pop %v1022
      %v1024 = vmul.f32 %v930, 1.442695
      %v1025 = vpow.pop %v1024
      %v1026 = vmul.f32 %v931, 1.442695
      %v1027 = vpow.pop %v1026
      %v1028 = vmul.f32 %v932, 1.442695
      %v1029 = vpow.pop %v1028
      %v1030 = vmul.f32 %v933, 1.442695
      %v1031 = vpow.pop %v1030
      %v1032 = vmul.f32 %v934, 1.442695
      %v1033 = vpow.pop %v1032
      %v1034 = vmul.f32 %v935, 1.442695
      %v1035 = vpow.pop %v1034
      %v1036 = vmul.f32 %v936, 1.442695
      %v1037 = vpow.pop %v1036
      %v1038 = vmul.f32 %v937, 1.442695
      %v1039 = vpow.pop %v1038
      %v1040 = vmul.f32 %v938, 1.442695
      %v1041 = vpow.pop %v1040
      %v1042 = vmul.f32 %v939, 1.442695
      %v1043 = vpow.pop %v1042
      %v1044 = vmul.f32 %v940, 1.442695
      %v1045 = vpow.pop %v1044
      %v1046 = vmul.f32 %v941, 1.442695
      %v1047 = vpow.pop %v1046
      %v1048 = vmul.f32 %v942, 1.442695
      %v1049 = vpow.pop %v1048
      %v1050 = vmul.f32 %v943, 1.442695
      %v1051 = vpow.pop %v1050
      %v1052 = vmul.f32 %v944, 1.442695
      %v1053 = vpow.pop %v1052
      %v1054 = vmul.f32 %v945, 1.442695
      %v1055 = vpow.pop %v1054
      %v1056 = vmul.f32 %v946, 1.442695
      %v1057 = vpow.pop %v1056
      %v1058 = vmul.f32 %v947, 1.442695
      %v1059 = vpow.pop %v1058
      %v1060 = vmul.f32 %v948, 1.442695
      %v1061 = vpow.pop %v1060
      %v1062 = vmul.f32 %v949, 1.442695
      %v1063 = vpow.pop %v1062
      %v1064 = vmul.f32 %v950, 1.442695
      %v1065 = vpow.pop %v1064
      %v1066 = vmul.f32 %v951, 1.442695
      %v1067 = vpow.pop %v1066
      %v1068 = vmul.f32 %v952, 1.442695
      %v1069 = vpow.pop %v1068
      %v1070 = vmul.f32 %v953, 1.442695
      %v1071 = vpow.pop %v1070
      %v1072 = vmul.f32 %v954, 1.442695
      %v1073 = vpow.pop %v1072
      %v1074 = vmul.f32 %v955, 1.442695
      %v1075 = vpow.pop %v1074
      %v1076 = vmul.f32 %v956, 1.442695
      %v1077 = vpow.pop %v1076
      %v1078 = vmul.f32 %v957, 1.442695
      %v1079 = vpow.pop %v1078
      %v1080 = vmul.f32 %v958, 1.442695
      %v1081 = vpow.pop %v1080
      %v1082 = vmul.f32 %v959, 1.442695
      %v1083 = vpow.pop %v1082
      %v1084 = vmul.f32 %v960, 1.442695
      %v1085 = vpow.pop %v1084
      %v1086 = vmul.f32 %v961, 1.442695
      %v1087 = vpow.pop %v1086
      %v1088 = vmul.f32 %v962, 1.442695
      %v1089 = vpow.pop %v1088
      %v1090 = vmul.f32 %v963, 1.442695
      %v1091 = vpow.pop %v1090
      %v1092 = vpack.c.bf16 %v969, %v965
      %v1093 = vpack.c.bf16 %v971, %v967
      %v1094 = vpack.c.bf16 %v977, %v973
      %v1095 = vpack.c.bf16 %v979, %v975
      %v1096 = vpack.c.bf16 %v985, %v981
      %v1097 = vpack.c.bf16 %v987, %v983
      %v1098 = vpack.c.bf16 %v993, %v989
      %v1099 = vpack.c.bf16 %v995, %v991
      %v1100 = vpack.c.bf16 %v1001, %v997
      %v1101 = vpack.c.bf16 %v1003, %v999
      %v1102 = vpack.c.bf16 %v1009, %v1005
      %v1103 = vpack.c.bf16 %v1011, %v1007
      %v1104 = vpack.c.bf16 %v1017, %v1013
      %v1105 = vpack.c.bf16 %v1019, %v1015
      %v1106 = vpack.c.bf16 %v1025, %v1021
      %v1107 = vpack.c.bf16 %v1027, %v1023
      %v1108 = vpack.c.bf16 %v1033, %v1029
      %v1109 = vpack.c.bf16 %v1035, %v1031
      %v1110 = vpack.c.bf16 %v1041, %v1037
      %v1111 = vpack.c.bf16 %v1043, %v1039
      %v1112 = vpack.c.bf16 %v1049, %v1045
      %v1113 = vpack.c.bf16 %v1051, %v1047
      %v1114 = vpack.c.bf16 %v1057, %v1053
      %v1115 = vpack.c.bf16 %v1059, %v1055
      %v1116 = vpack.c.bf16 %v1065, %v1061
      %v1117 = vpack.c.bf16 %v1067, %v1063
      %v1118 = vpack.c.bf16 %v1073, %v1069
      %v1119 = vpack.c.bf16 %v1075, %v1071
      %v1120 = vpack.c.bf16 %v1081, %v1077
      %v1121 = vpack.c.bf16 %v1083, %v1079
      %v1122 = vpack.c.bf16 %v1089, %v1085
      %v1123 = vpack.c.bf16 %v1091, %v1087
      %v1129 = vunpack.c.l.b16 %v505
      %v1130 = vunpack.c.h.b16 %v505
      %v1131 = vunpack.c.l.b16 %v506
      %v1132 = vunpack.c.h.b16 %v506
      %v1133 = vunpack.c.l.b16 %v507
      %v1134 = vunpack.c.h.b16 %v507
      %v1135 = vunpack.c.l.b16 %v508
      %v1136 = vunpack.c.h.b16 %v508
      %v1137 = vunpack.c.l.b16 %v509
      %v1138 = vunpack.c.h.b16 %v509
      %v1139 = vpack.c.b16 %v1131, %v1129
      %v1140 = vpack.c.b16 %v1132, %v1130
      %v1141 = vpack.c.b16 %v1135, %v1133
      %v1142 = vpack.c.b16 %v1136, %v1134
      %v1143 = vpack.c.b16 %v1137, %v1137
      %v1144 = vpack.c.b16 %v1138, %v1138
      %1151 = vmatprep.subr.bf16.mxu0 %v1107
      %1152 = vmatpush1.bf16.xpose.msra.mxu0 %v1106
      %1153 = vmatprep.subr.bf16.mxu0 %v1105
      %1154 = vmatpush1.bf16.xpose.msra.mxu0 %v1104
      %1155 = vmatprep.subr.bf16.mxu0 %v1103
      %1156 = vmatpush1.bf16.xpose.msra.mxu0 %v1102
      %1157 = vmatprep.subr.bf16.mxu0 %v1101
      %1158 = vmatpush1.bf16.xpose.msra.mxu0 %v1100
      %1159 = vmatprep.subr.bf16.mxu0 %v1099
      %1160 = vmatpush1.bf16.xpose.msra.mxu0 %v1098
      %1161 = vmatprep.subr.bf16.mxu0 %v1097
      %1162 = vmatpush1.bf16.xpose.msra.mxu0 %v1096
      %1163 = vmatprep.subr.bf16.mxu0 %v1095
      %1164 = vmatpush1.bf16.xpose.msra.mxu0 %v1094
      %1165 = vmatprep.subr.bf16.mxu0 %v1093
      %1166 = vmatpush1.bf16.xpose.msra.mxu0 %v1092
      %1167 = vmatprep.subr.bf16.mxu0 %v1123
      %1168 = vmatpush2.bf16.xpose.msra.mxu0 %v1122
      %1169 = vmatprep.subr.bf16.mxu0 %v1121
      %1170 = vmatpush2.bf16.xpose.msra.mxu0 %v1120
      %1171 = vmatprep.subr.bf16.mxu0 %v1119
      %1172 = vmatpush2.bf16.xpose.msra.mxu0 %v1118
      %1173 = vmatprep.subr.bf16.mxu0 %v1117
      %1174 = vmatpush2.bf16.xpose.msra.mxu0 %v1116
      %1175 = vmatprep.subr.bf16.mxu0 %v1115
      %1176 = vmatpush2.bf16.xpose.msra.mxu0 %v1114
      %1177 = vmatprep.subr.bf16.mxu0 %v1113
      %1178 = vmatpush2.bf16.xpose.msra.mxu0 %v1112
      %1179 = vmatprep.subr.bf16.mxu0 %v1111
      %1180 = vmatpush2.bf16.xpose.msra.mxu0 %v1110
      %1181 = vmatprep.subr.bf16.mxu0 %v1109
      %1182 = vmatpush2.bf16.xpose.msra.mxu0 %v1108
      %1183 = vmatprep.mubr.bf16.mxu0 %v1140
      %1184 = vmatmul.mubr.bf16.gmra.mxu0 %v1139
      %v1185 = vpop.f32.mrf.mxu0
      %v1186 = vadd.f32 0.0, %v1185
      %v1187 = vpop.f32.mrf.mxu0
      %v1188 = vadd.f32 0.0, %v1187
      %v1189 = vpop.f32.mrf.mxu0
      %v1190 = vadd.f32 0.0, %v1189
      %v1191 = vpop.f32.mrf.mxu0
      %v1192 = vadd.f32 0.0, %v1191
      %1193 = vmatprep.mubr.bf16.mxu0 %v1142
      %1194 = vmatmul.mubr.bf16.gmra.mxu0 %v1141
      %v1195 = vpop.f32.mrf.mxu0
      %v1196 = vadd.f32 0.0, %v1195
      %v1197 = vpop.f32.mrf.mxu0
      %v1198 = vadd.f32 0.0, %v1197
      %v1199 = vpop.f32.mrf.mxu0
      %v1200 = vadd.f32 0.0, %v1199
      %v1201 = vpop.f32.mrf.mxu0
      %v1202 = vadd.f32 0.0, %v1201
      %1203 = vmatprep.mubr.bf16.mxu0 %v1144
      %1204 = vmatmul.mubr.bf16.gmra.mxu0 %v1143
      %v1205 = vpop.f32.mrf.mxu0
      %v1206 = vadd.f32 0.0, %v1205
      %v1207 = vpop.f32.mrf.mxu0
      %v1208 = vadd.f32 0.0, %v1207
      %v1209 = vpop.f32.mrf.mxu0
      %v1210 = vpop.f32.mrf.mxu0
      %1211 = vdwg.mxu0
      %v1212 = vrcp.pop %v1206
      %v1213 = vrcp.pop %v1208
      %v1214 = vlaneseq
      %v1215 = vshrl.u32 %v1214, 7
      %v1216 = vsub.s32 0, %v1215
      %v1217 = vrot.slane %v1212, %v1216
      %v1218 = vlaneseq
      %v1219 = vshrl.u32 %v1218, 7
      %v1220 = vsub.s32 0, %v1219
      %v1221 = vrot.slane %v1213, %v1220
      %v1222 = vmul.f32 %v1186, %v1217
      %v1223 = vmul.f32 %v1188, %v1221
      %v1224 = vmul.f32 %v1190, %v1217
      %v1225 = vmul.f32 %v1192, %v1221
      %v1226 = vmul.f32 %v1196, %v1217
      %v1227 = vmul.f32 %v1198, %v1221
      %v1228 = vmul.f32 %v1200, %v1217
      %v1229 = vmul.f32 %v1202, %v1221
      %s1230 = smul.addr %s497, 8
      %s1231 = scalar_lea.vmem %s211, %s1230
      %v1232 = vld [vmem:[%s1231] sm:$0xff]
      %v1233 = vld [vmem:[%s1231 + $0x8] sm:$0xff]
      %v1234 = vld [vmem:[%s1231 + $0x10] sm:$0xff]
      %v1235 = vld [vmem:[%s1231 + $0x18] sm:$0xff]
      %v1236 = vld [vmem:[%s1231 + $0x20] sm:$0xff]
      %v1237 = vld [vmem:[%s1231 + $0x28] sm:$0xff]
      %v1238 = vld [vmem:[%s1231 + $0x30] sm:$0xff]
      %v1239 = vld [vmem:[%s1231 + $0x38] sm:$0xff]
      %s1240 = sld [smem:[#allocation3]]
      %v1241 = vstv %s1240
      %v1242 = vmul.f32 %v1241, %v1222
      %v1243 = vmul.f32 %v1241, %v1223
      %v1244 = vmul.f32 %v1241, %v1224
      %v1245 = vmul.f32 %v1241, %v1225
      %v1246 = vmul.f32 %v1241, %v1226
      %v1247 = vmul.f32 %v1241, %v1227
      %v1248 = vmul.f32 %v1241, %v1228
      %v1249 = vmul.f32 %v1241, %v1229
      %v1250 = vadd.f32 %v1242, %v1232
      %v1251 = vadd.f32 %v1243, %v1233
      %v1252 = vadd.f32 %v1244, %v1234
      %v1253 = vadd.f32 %v1245, %v1235
      %v1254 = vadd.f32 %v1246, %v1236
      %v1255 = vadd.f32 %v1247, %v1237
      %v1256 = vadd.f32 %v1248, %v1238
      %v1257 = vadd.f32 %v1249, %v1239
      %1258 = vst [vmem:[%s220] sm:$0xff] %v1250
      %1259 = vst [vmem:[%s220 + $0x8] sm:$0xff] %v1251
      %1260 = vst [vmem:[%s220 + $0x10] sm:$0xff] %v1252
      %1261 = vst [vmem:[%s220 + $0x18] sm:$0xff] %v1253
      %1262 = vst [vmem:[%s220 + $0x20] sm:$0xff] %v1254
      %1263 = vst [vmem:[%s220 + $0x28] sm:$0xff] %v1255
      %1264 = vst [vmem:[%s220 + $0x30] sm:$0xff] %v1256
      %1265 = vst [vmem:[%s220 + $0x38] sm:$0xff] %v1257
      %s1266 = smul.u32 2, %s21
      %p1267 = scmp.lt.s32.totalorder %s20, 1
      %s1268 = scalar_select %p1267, %s20, 1
      %p1269 = scmp.lt.s32.totalorder %s1266, 1
      %s1270 = scalar_select %p1269, %s1266, 1
      %s1271 = smul.addr %s1268, 8
      %s1272 = sadd.s32 %s1270, %s1271
      %s1273 = smul.addr %s1272, 8
      %s1274 = scalar_lea.vmem %s4, %s1273
      // Predicated region
      $region41: #{self_attn_forward.1} parent=35 // pred_check
        %p1275 = pneg %p137
      $region42: #{self_attn_forward.1} parent=35 // pred_check_branch
        %1277 = sbr.rel (%p1275) target = $region44
      $region43: #{self_attn_forward.1} parent=35 // pred_region
        %s1278 = smul.u32 2, %s21
      $region44: #{self_attn_forward.1} parent=35 // pred_fallthru
        _
    $region36: #{self_attn_forward.1} parent=5 // pred_fallthru
      _
    %p1279 = scmp.le.s32.totalorder 2, %s11
    // Predicated region
    $region45: #{self_attn_forward.1} parent=5 // pred_check
      %p1280 = pneg %p1279
    $region46: #{self_attn_forward.1} parent=5 // pred_check_branch
      %1282 = sbr.rel (%p1280) target = $region48
    $region47: #{self_attn_forward.1} parent=5 // pred_region
      %s1283 = ssub.s32 %s11, 2
      // Predicated region
      $region49: #{self_attn_forward.1} parent=47 // pred_check
        %p1284 = pneg %p143
      $region50: #{self_attn_forward.1} parent=47 // pred_check_branch
        %1286 = sbr.rel (%p1284) target = $region52
      $region51: #{self_attn_forward.1} parent=47 // pred_region
        %s1287 = smul.u32 2, %s23
        %p1288 = scmp.lt.s32.totalorder %s22, 1
        %s1289 = scalar_select %p1288, %s22, 1
        %p1290 = scmp.lt.s32.totalorder %s1287, 1
        %s1291 = scalar_select %p1290, %s1287, 1
        %s1292 = smul.addr %s1289, 8
        %s1293 = sadd.s32 %s1291, %s1292
        %s1294 = smul.addr %s1293, 8
        %s1295 = scalar_lea.vmem %s4, %s1294
      $region52: #{self_attn_forward.1} parent=47 // pred_fallthru
        _
    $region48: #{self_attn_forward.1} parent=5 // pred_fallthru
      _
  $region6: #{self_attn_forward.1} parent=0 // loop_footer
    %s15 = sadd.s32 1, %s11
  $region7: #{self_attn_forward.1} parent=0 // loop_footer_branch
    %10 = sbr.rel target = $region3
  $region8: #{self_attn_forward.1} parent=0 // loop_exit
    _

</llo_original>
